<compile_context>
chip_gen: v7x
topology: tpu7x:2x2x1
jax: 0.10.0
libtpu: 0.0.40
codegen_flags: <defaults>
</compile_context>

<pallas_src>
import functools

import jax
import jax.numpy as jnp
from jax.experimental import pallas as pl
from jax.experimental.pallas import tpu as pltpu


def _round_up(x, m):
    return ((x + m - 1) // m) * m


def actor_critic_kernel(state_ref, action_ref, w_ref, b_ref, out_ref, *,
                        obs_pad, hidden, n_actions):
    W = 2 * hidden                 # fused lane width (=128 for hidden=64)
    A = n_actions

    x = state_ref[...].astype(jnp.bfloat16)          # (TB, OBS_pad) bf16 operands

    # packed bf16 weight blob (16-row aligned static slices)
    w1 = w_ref[0:obs_pad, :]                          # (OBS_pad, W)   [aw1 | cw1]
    w2 = w_ref[obs_pad:obs_pad + W, :]                # (W, W)         blockdiag(aw2, cw2)
    w3 = w_ref[obs_pad + W:obs_pad + 2 * W, :]        # (W, W)         blockdiag(aw3, cw3)
    b1 = b_ref[0:1, :]                                # (1, W) f32
    b2 = b_ref[1:2, :]
    b3 = b_ref[2:3, :]

    # fused actor|critic MLP — one full-width MXU pass per layer, f32 accumulate
    h = jnp.tanh(jnp.dot(x, w1, preferred_element_type=jnp.float32) + b1)
    h = jnp.tanh(jnp.dot(h.astype(jnp.bfloat16), w2,
                         preferred_element_type=jnp.float32) + b2)
    o3 = jnp.dot(h.astype(jnp.bfloat16), w3,
                 preferred_element_type=jnp.float32) + b3      # (TB, W) f32
    # cols 0:A = actor logits, col A = critic value, rest = 0

    lane = jax.lax.broadcasted_iota(jnp.int32, o3.shape, 1)    # (TB, W)
    valid = lane < A

    # numerically-stable masked softmax / log-softmax over the A real actions
    logits = jnp.where(valid, o3, jnp.float32(-1e30))
    m = jnp.max(logits, axis=-1, keepdims=True)
    e = jnp.where(valid, jnp.exp(logits - m), 0.0)
    s = jnp.sum(e, axis=-1, keepdims=True)
    probs = e * pl.reciprocal(s, approx=True)                  # EUP-slot reciprocal
    log_probs = jnp.where(valid, (logits - m) - jnp.log(s), 0.0)

    # Categorical(action_probs).log_prob(action) via one-hot gather
    act = action_ref[...]                                      # (TB, 1) int32
    onehot = (lane == act).astype(jnp.float32)
    logp = jnp.sum(onehot * log_probs, axis=-1, keepdims=True)  # (TB, 1)

    # entropy = -sum_a p_a log p_a  (padded lanes contribute exactly 0)
    ent = -jnp.sum(probs * log_probs, axis=-1, keepdims=True)   # (TB, 1)

    # critic value lives in column A of the fused layer-3 output
    value = jnp.sum(jnp.where(lane == A, o3, 0.0), axis=-1, keepdims=True)

    # single lane-dense output slab: col0=logp, col1=value, col2=entropy
    out = jnp.where(lane == 0, logp, 0.0)
    out = jnp.where(lane == 1, value, out)
    out = jnp.where(lane == 2, ent, out)
    out_ref[...] = out


@functools.partial(jax.jit, static_argnames=("hidden", "n_actions"))
def evaluate(state, action, w_packed, b_packed, *, hidden, n_actions):
    """Pallas equivalent of ActorCritic.evaluate(state, action).

    state:    (B, OBS) float32
    action:   (B,)     int32
    w_packed: (OBS_pad + 4*hidden, 2*hidden) bf16  (from pack_params)
    b_packed: (8, 2*hidden)                  f32
    returns (action_logprobs (B,), state_value (B,), dist_entropy (B,))
    """
    B, obs = state.shape
    W = 2 * hidden
    obs_pad = w_packed.shape[0] - 2 * W

    # batch tiling: weights stay resident, state/output stream and pipeline
    TB = min(_round_up(B, 8), 1024)
    B_pad = _round_up(B, TB)

    x = state.astype(jnp.float32)
    if (B_pad != B) or (obs_pad != obs):
        x = jnp.pad(x, ((0, B_pad - B), (0, obs_pad - obs)))
    act = action.reshape(B, 1).astype(jnp.int32)
    if B_pad != B:
        act = jnp.pad(act, ((0, B_pad - B), (0, 0)))

    kernel = functools.partial(actor_critic_kernel, obs_pad=obs_pad,
                               hidden=hidden, n_actions=n_actions)

    out = pl.pallas_call(
        kernel,
        out_shape=jax.ShapeDtypeStruct((B_pad, W), jnp.float32),
        grid=(B_pad // TB,),
        in_specs=[
            pl.BlockSpec((TB, obs_pad), lambda i: (i, 0)),      # state tile
            pl.BlockSpec((TB, 1), lambda i: (i, 0)),            # action tile
            pl.BlockSpec(w_packed.shape, lambda i: (0, 0)),     # weights (resident)
            pl.BlockSpec(b_packed.shape, lambda i: (0, 0)),     # biases (resident)
        ],
        out_specs=pl.BlockSpec((TB, W), lambda i: (i, 0)),
        compiler_params=pltpu.CompilerParams(
            dimension_semantics=("parallel",)),
    )(x, act, w_packed, b_packed)

    # columns 0/1/2 of the lane-dense slab; squeeze like the PyTorch reference
    return out[:B, 0], out[:B, 1], out[:B, 2]


def init_params(key, obs_dim, n_actions, hidden=64):
    """Deterministic synthetic init (shapes match the PyTorch module).

    Weights stored as (in, out); biases as (1, out).
    """
    # TODO(synk): PyTorch uses orthogonal_ init; deterministic scaled-normal
    # init is used here since only forward semantics are being reproduced.
    keys = jax.random.split(key, 6)

    def lin(k, fan_in, fan_out, std):
        w = jax.random.normal(k, (fan_in, fan_out), jnp.float32)
        w = w * (std / jnp.sqrt(jnp.float32(fan_in)))
        b = jnp.zeros((1, fan_out), jnp.float32)
        return w, b

    sqrt2 = float(jnp.sqrt(2.0))
    aw1, ab1 = lin(keys[0], obs_dim, hidden, sqrt2)
    aw2, ab2 = lin(keys[1], hidden, hidden, sqrt2)
    aw3, ab3 = lin(keys[2], hidden, n_actions, 0.01)
    cw1, cb1 = lin(keys[3], obs_dim, hidden, sqrt2)
    cw2, cb2 = lin(keys[4], hidden, hidden, sqrt2)
    cw3, cb3 = lin(keys[5], hidden, 1, 1.0)
    return (aw1, ab1, aw2, ab2, aw3, ab3,
            cw1, cb1, cw2, cb2, cw3, cb3)


def pack_params(params, obs_dim, n_actions, hidden=64):
    """Host-side fusion of the 12 tensors into one bf16 weight blob + f32 biases.

    Blob rows: [0, obs_pad)            -> [aw1 | cw1]
               [obs_pad, obs_pad+W)    -> blockdiag(aw2, cw2)
               [obs_pad+W, obs_pad+2W) -> blockdiag(aw3, cw3)  (cols 0:A actor, col A critic)
    obs_pad is rounded to 16 so every static slice is bf16-sublane-tile aligned.
    Biases stay f32 (exact) in a small (8, W) array, rows 0/1/2.
    """
    (aw1, ab1, aw2, ab2, aw3, ab3,
     cw1, cb1, cw2, cb2, cw3, cb3) = params
    W = 2 * hidden
    obs_pad = _round_up(obs_dim, 16)

    w1 = jnp.zeros((obs_pad, W), jnp.float32)
    w1 = w1.at[:obs_dim, :hidden].set(aw1)
    w1 = w1.at[:obs_dim, hidden:].set(cw1)

    w2 = jnp.zeros((W, W), jnp.float32)
    w2 = w2.at[:hidden, :hidden].set(aw2)
    w2 = w2.at[hidden:, hidden:].set(cw2)

    w3 = jnp.zeros((W, W), jnp.float32)
    w3 = w3.at[:hidden, :n_actions].set(aw3)
    w3 = w3.at[hidden:, n_actions:n_actions + 1].set(cw3)

    w_packed = jnp.concatenate([w1, w2, w3], axis=0).astype(jnp.bfloat16)

    b = jnp.zeros((8, W), jnp.float32)
    b = b.at[0, :hidden].set(ab1[0, :]).at[0, hidden:].set(cb1[0, :])
    b = b.at[1, :hidden].set(ab2[0, :]).at[1, hidden:].set(cb2[0, :])
    b = b.at[2, :n_actions].set(ab3[0, :]).at[2, n_actions].set(cb3[0, 0])
    return w_packed, b


def reference_evaluate(state, action, params):
    """Pure-JAX f32 reference for correctness check."""
    (aw1, ab1, aw2, ab2, aw3, ab3,
     cw1, cb1, cw2, cb2, cw3, cb3) = params
    h = jnp.tanh(state @ aw1 + ab1)
    h = jnp.tanh(h @ aw2 + ab2)
    logits = h @ aw3 + ab3
    logp_all = jax.nn.log_softmax(logits, axis=-1)
    probs = jax.nn.softmax(logits, axis=-1)
    logp = jnp.take_along_axis(logp_all, action[:, None], axis=-1)[:, 0]
    ent = -jnp.sum(probs * logp_all, axis=-1)
    hc = jnp.tanh(state @ cw1 + cb1)
    hc = jnp.tanh(hc @ cw2 + cb2)
    value = (hc @ cw3 + cb3)[:, 0]
    return logp, value, ent


if __name__ == "__main__":
    B, OBS, N_ACT, HID = 8, 8, 6, 64

    key = jax.random.PRNGKey(0)
    k_state, k_action, k_params = jax.random.split(key, 3)

    state = jax.random.normal(k_state, (B, OBS), jnp.float32)
    action = jax.random.randint(k_action, (B,), 0, N_ACT, jnp.int32)
    params = init_params(k_params, OBS, N_ACT, HID)
    w_packed, b_packed = pack_params(params, OBS, N_ACT, HID)

    logp, value, ent = evaluate(state, action, w_packed, b_packed,
                                hidden=HID, n_actions=N_ACT)
    jax.block_until_ready((logp, value, ent))

    # sanity check vs pure-JAX f32 reference.
    # Tolerance is loosened vs the original 1e-5 because the kernel uses bf16
    # matmul operands (f32 accumulate) and an approximate EUP reciprocal in
    # the softmax, per the v6e/v7x performance guidance.
    logp_r, value_r, ent_r = reference_evaluate(state, action, params)
    assert jnp.allclose(logp, logp_r, atol=5e-2, rtol=5e-2), "logprob mismatch"
    assert jnp.allclose(value, value_r, atol=5e-2, rtol=5e-2), "value mismatch"
    assert jnp.allclose(ent, ent_r, atol=5e-2, rtol=5e-2), "entropy mismatch"

    print("KERNEL_OK")
</pallas_src>

<mosaic_0001>
module attributes {stable_mosaic.version = 11 : i64} {
  func.func @actor_critic_kernel(%arg0: i32, %arg1: memref<8x16xf32, #tpu.memory_space<vmem>>, %arg2: memref<8x1xi32, #tpu.memory_space<vmem>>, %arg3: memref<272x128xbf16, #tpu.memory_space<vmem>>, %arg4: memref<8x128xf32, #tpu.memory_space<vmem>>, %arg5: memref<8x128xf32, #tpu.memory_space<vmem>>) attributes {dimension_semantics = [#tpu.dimension_semantics<parallel>], iteration_bounds = array<i64: 1>, scalar_prefetch = 0 : i64, scratch_operands = 0 : i64, tpu.core_type = #tpu.core_type<tc>, window_params = [{transform_indices = @transform_0, window_bounds = array<i64: 8, 16>}, {transform_indices = @transform_1, window_bounds = array<i64: 8, 1>}, {pipeline_mode = #tpu.pipeline_mode<synchronous>, transform_indices = @transform_2, window_bounds = array<i64: 272, 128>}, {pipeline_mode = #tpu.pipeline_mode<synchronous>, transform_indices = @transform_3, window_bounds = array<i64: 8, 128>}, {transform_indices = @transform_4, window_bounds = array<i64: 8, 128>}]} {
    %c0 = arith.constant 0 : index
    %c0_0 = arith.constant 0 : index
    %0 = vector.load %arg1[%c0, %c0_0] : memref<8x16xf32, #tpu.memory_space<vmem>>, vector<8x16xf32>
    %1 = arith.truncf %0 : vector<8x16xf32> to vector<8x16xbf16>
    %c0_1 = arith.constant 0 : index
    %c0_2 = arith.constant 0 : index
    %2 = vector.load %arg3[%c0_1, %c0_2] : memref<272x128xbf16, #tpu.memory_space<vmem>>, vector<16x128xbf16>
    %c16 = arith.constant 16 : index
    %c0_3 = arith.constant 0 : index
    %3 = vector.load %arg3[%c16, %c0_3] : memref<272x128xbf16, #tpu.memory_space<vmem>>, vector<128x128xbf16>
    %c144 = arith.constant 144 : index
    %c0_4 = arith.constant 0 : index
    %4 = vector.load %arg3[%c144, %c0_4] : memref<272x128xbf16, #tpu.memory_space<vmem>>, vector<128x128xbf16>
    %c0_5 = arith.constant 0 : index
    %c0_6 = arith.constant 0 : index
    %5 = vector.load %arg4[%c0_5, %c0_6] : memref<8x128xf32, #tpu.memory_space<vmem>>, vector<1x128xf32>
    %c1 = arith.constant 1 : index
    %c0_7 = arith.constant 0 : index
    %6 = vector.load %arg4[%c1, %c0_7] : memref<8x128xf32, #tpu.memory_space<vmem>>, vector<1x128xf32>
    %c2 = arith.constant 2 : index
    %c0_8 = arith.constant 0 : index
    %7 = vector.load %arg4[%c2, %c0_8] : memref<8x128xf32, #tpu.memory_space<vmem>>, vector<1x128xf32>
    %cst = arith.constant dense<0.000000e+00> : vector<8x128xf32>
    %8 = tpu.matmul %1, %2, %cst {dimension_numbers = #tpu.dot_dimension_numbers<[1], [0], [0], [1], [0, 0, 1, 1], [], []>} : vector<8x16xbf16>, vector<16x128xbf16>, vector<8x128xf32> -> vector<8x128xf32>
    %9 = vector.broadcast %5 : vector<1x128xf32> to vector<8x128xf32>
    %10 = arith.addf %8, %9 : vector<8x128xf32>
    %11 = math.tanh %10 : vector<8x128xf32>
    %12 = arith.truncf %11 : vector<8x128xf32> to vector<8x128xbf16>
    %cst_9 = arith.constant dense<0.000000e+00> : vector<8x128xf32>
    %13 = tpu.matmul %12, %3, %cst_9 {dimension_numbers = #tpu.dot_dimension_numbers<[1], [0], [0], [1], [0, 0, 1, 1], [], []>} : vector<8x128xbf16>, vector<128x128xbf16>, vector<8x128xf32> -> vector<8x128xf32>
    %14 = vector.broadcast %6 : vector<1x128xf32> to vector<8x128xf32>
    %15 = arith.addf %13, %14 : vector<8x128xf32>
    %16 = math.tanh %15 : vector<8x128xf32>
    %17 = arith.truncf %16 : vector<8x128xf32> to vector<8x128xbf16>
    %cst_10 = arith.constant dense<0.000000e+00> : vector<8x128xf32>
    %18 = tpu.matmul %17, %4, %cst_10 {dimension_numbers = #tpu.dot_dimension_numbers<[1], [0], [0], [1], [0, 0, 1, 1], [], []>} : vector<8x128xbf16>, vector<128x128xbf16>, vector<8x128xf32> -> vector<8x128xf32>
    %19 = vector.broadcast %7 : vector<1x128xf32> to vector<8x128xf32>
    %20 = arith.addf %18, %19 : vector<8x128xf32>
    %21 = tpu.iota {dimensions = array<i32: 1>} : vector<8x128xi32>
    %c6_i32 = arith.constant 6 : i32
    %22 = vector.broadcast %c6_i32 : i32 to vector<8x128xi32>
    %23 = arith.cmpi slt, %21, %22 : vector<8x128xi32>
    %cst_11 = arith.constant -1.000000e+30 : f32
    %24 = vector.broadcast %cst_11 : f32 to vector<8x128xf32>
    %25 = arith.select %23, %20, %24 : vector<8x128xi1>, vector<8x128xf32>
    %cst_12 = arith.constant dense<0xFF800000> : vector<8xf32>
    %26 = vector.multi_reduction <maximumf>, %25, %cst_12 [1] : vector<8x128xf32> to vector<8xf32>
    %27 = vector.shape_cast %26 : vector<8xf32> to vector<8x1xf32>
    %28 = vector.broadcast %27 : vector<8x1xf32> to vector<8x128xf32>
    %29 = arith.subf %25, %28 : vector<8x128xf32>
    %30 = math.exp %29 : vector<8x128xf32>
    %cst_13 = arith.constant 0.000000e+00 : f32
    %31 = vector.broadcast %cst_13 : f32 to vector<8x128xf32>
    %32 = arith.select %23, %30, %31 : vector<8x128xi1>, vector<8x128xf32>
    %cst_14 = arith.constant dense<0.000000e+00> : vector<8xf32>
    %33 = vector.multi_reduction <add>, %32, %cst_14 [1] : vector<8x128xf32> to vector<8xf32>
    %34 = vector.shape_cast %33 : vector<8xf32> to vector<8x1xf32>
    %35 = tpu.reciprocal %34 {approx = true} : vector<8x1xf32> -> vector<8x1xf32>
    %36 = vector.broadcast %35 : vector<8x1xf32> to vector<8x128xf32>
    %37 = arith.mulf %32, %36 : vector<8x128xf32>
    %38 = vector.broadcast %27 : vector<8x1xf32> to vector<8x128xf32>
    %39 = arith.subf %25, %38 : vector<8x128xf32>
    %40 = math.log %34 : vector<8x1xf32>
    %41 = vector.broadcast %40 : vector<8x1xf32> to vector<8x128xf32>
    %42 = arith.subf %39, %41 : vector<8x128xf32>
    %cst_15 = arith.constant 0.000000e+00 : f32
    %43 = vector.broadcast %cst_15 : f32 to vector<8x128xf32>
    %44 = arith.select %23, %42, %43 : vector<8x128xi1>, vector<8x128xf32>
    %c0_16 = arith.constant 0 : index
    %c0_17 = arith.constant 0 : index
    %45 = vector.load %arg2[%c0_16, %c0_17] : memref<8x1xi32, #tpu.memory_space<vmem>>, vector<8x1xi32>
    %46 = vector.broadcast %45 : vector<8x1xi32> to vector<8x128xi32>
    %47 = arith.cmpi eq, %21, %46 : vector<8x128xi32>
    %48 = arith.extui %47 : vector<8x128xi1> to vector<8x128xi32>
    %49 = arith.sitofp %48 : vector<8x128xi32> to vector<8x128xf32>
    %50 = arith.mulf %49, %44 : vector<8x128xf32>
    %cst_18 = arith.constant dense<0.000000e+00> : vector<8xf32>
    %51 = vector.multi_reduction <add>, %50, %cst_18 [1] : vector<8x128xf32> to vector<8xf32>
    %52 = vector.shape_cast %51 : vector<8xf32> to vector<8x1xf32>
    %53 = arith.mulf %37, %44 : vector<8x128xf32>
    %cst_19 = arith.constant dense<0.000000e+00> : vector<8xf32>
    %54 = vector.multi_reduction <add>, %53, %cst_19 [1] : vector<8x128xf32> to vector<8xf32>
    %55 = vector.shape_cast %54 : vector<8xf32> to vector<8x1xf32>
    %cst_20 = arith.constant 0.000000e+00 : f32
    %56 = vector.broadcast %cst_20 : f32 to vector<8x1xf32>
    %57 = arith.subf %56, %55 : vector<8x1xf32>
    %c6_i32_21 = arith.constant 6 : i32
    %58 = vector.broadcast %c6_i32_21 : i32 to vector<8x128xi32>
    %59 = arith.cmpi eq, %21, %58 : vector<8x128xi32>
    %cst_22 = arith.constant 0.000000e+00 : f32
    %60 = vector.broadcast %cst_22 : f32 to vector<8x128xf32>
    %61 = arith.select %59, %20, %60 : vector<8x128xi1>, vector<8x128xf32>
    %cst_23 = arith.constant dense<0.000000e+00> : vector<8xf32>
    %62 = vector.multi_reduction <add>, %61, %cst_23 [1] : vector<8x128xf32> to vector<8xf32>
    %63 = vector.shape_cast %62 : vector<8xf32> to vector<8x1xf32>
    %c0_i32 = arith.constant 0 : i32
    %64 = vector.broadcast %c0_i32 : i32 to vector<8x128xi32>
    %65 = arith.cmpi eq, %21, %64 : vector<8x128xi32>
    %cst_24 = arith.constant 0.000000e+00 : f32
    %66 = vector.shape_cast %52 : vector<8x1xf32> to vector<8x1xf32>
    %67 = vector.broadcast %66 : vector<8x1xf32> to vector<8x128xf32>
    %68 = vector.broadcast %cst_24 : f32 to vector<8x128xf32>
    %69 = arith.select %65, %67, %68 : vector<8x128xi1>, vector<8x128xf32>
    %c1_i32 = arith.constant 1 : i32
    %70 = vector.broadcast %c1_i32 : i32 to vector<8x128xi32>
    %71 = arith.cmpi eq, %21, %70 : vector<8x128xi32>
    %72 = vector.shape_cast %63 : vector<8x1xf32> to vector<8x1xf32>
    %73 = vector.broadcast %72 : vector<8x1xf32> to vector<8x128xf32>
    %74 = arith.select %71, %73, %69 : vector<8x128xi1>, vector<8x128xf32>
    %c2_i32 = arith.constant 2 : i32
    %75 = vector.broadcast %c2_i32 : i32 to vector<8x128xi32>
    %76 = arith.cmpi eq, %21, %75 : vector<8x128xi32>
    %77 = vector.shape_cast %57 : vector<8x1xf32> to vector<8x1xf32>
    %78 = vector.broadcast %77 : vector<8x1xf32> to vector<8x128xf32>
    %79 = arith.select %76, %78, %74 : vector<8x128xi1>, vector<8x128xf32>
    %c0_25 = arith.constant 0 : index
    %c0_26 = arith.constant 0 : index
    %80 = vector.load %arg5[%c0_25, %c0_26] : memref<8x128xf32, #tpu.memory_space<vmem>>, vector<8x128xf32>
    tpu.vector_store %arg5[%c0_25, %c0_26], %79 {strides = array<i32>} : memref<8x128xf32, #tpu.memory_space<vmem>>, vector<8x128xf32>,
    return
  }
  func.func @transform_0(%arg0: i32) -> (i32, i32) {
    %c0_i32 = arith.constant 0 : i32
    %c0_i32_0 = arith.constant 0 : i32
    return %arg0, %c0_i32 : i32, i32
  }
  func.func @transform_1(%arg0: i32) -> (i32, i32) {
    %c0_i32 = arith.constant 0 : i32
    %c0_i32_0 = arith.constant 0 : i32
    return %arg0, %c0_i32 : i32, i32
  }
  func.func @transform_2(%arg0: i32) -> (i32, i32) {
    %c0_i32 = arith.constant 0 : i32
    %c0_i32_0 = arith.constant 0 : i32
    %c0_i32_1 = arith.constant 0 : i32
    return %c0_i32, %c0_i32_0 : i32, i32
  }
  func.func @transform_3(%arg0: i32) -> (i32, i32) {
    %c0_i32 = arith.constant 0 : i32
    %c0_i32_0 = arith.constant 0 : i32
    %c0_i32_1 = arith.constant 0 : i32
    return %c0_i32, %c0_i32_0 : i32, i32
  }
  func.func @transform_4(%arg0: i32) -> (i32, i32) {
    %c0_i32 = arith.constant 0 : i32
    %c0_i32_0 = arith.constant 0 : i32
    return %arg0, %c0_i32 : i32, i32
  }
}

</mosaic_0001>

<llo_original>
// kernel: evaluate.1
$region0: #{evaluate.1}
  #allocation0 [shape = 'u32[]', space=smem, size = 0x4, offset = 0x4, fixed_abs, tag = 'smem constant byte address 0x4 - core index']
  #allocation1 [shape = 'u32[144,128]{1,0:T(1,128)}', space=vmem, size = 0x12000, scoped, tag = 'internal scratch']
  %s0 = inlined_call_operand.vmem [shape: f32[8,16], index: 0, kind: input, shape index: {}]
  %s1 = inlined_call_operand.vmem [shape: s32[8,1], index: 1, kind: input, shape index: {}]
  %s2 = inlined_call_operand.hbm [shape: bf16[272,128], index: 2, kind: input, shape index: {}]
  %s3 = inlined_call_operand.vmem [shape: f32[8,128], index: 3, kind: input, shape index: {}]
  %s4 = inlined_call_operand.vmem [shape: f32[8,128], index: 4, kind: output, shape index: {}]
  %s5 = sld [smem:[#allocation0]]
  $region30: #{evaluate.1} parent=0
    _
  %s7 = ssub.s32 1, %s5
  %s8 = scalar_select 0, %s7, %s5
  $region1: #{evaluate.1} parent=0
    #allocation2 [shape = 'u8[69632]{0}', space=vmem, size = 0x11000, scoped, tag = 'input window, operand 2, single buffered']
    #allocation3 [shape = 's32[1]{0}', space=sflag, size = 0x4, scoped, tag = 'scoped memory for evaluate.1']
    %9 = vsyncpa [#allocation3], 0
    // Predicated region
    $region2: #{evaluate.1} parent=1 // pred_check
      _
    $region3: #{evaluate.1} parent=1 // pred_check_branch
      %11 = sbr.rel (0) target = $region5
    $region4: #{evaluate.1} parent=1 // pred_region
      _
    $region5: #{evaluate.1} parent=1 // pred_fallthru
      _
    // Predicated region
    $region6: #{evaluate.1} parent=1 // pred_check
      _
    $region7: #{evaluate.1} parent=1 // pred_check_branch
      %13 = sbr.rel (0) target = $region9
    $region8: #{evaluate.1} parent=1 // pred_region
      _
    $region9: #{evaluate.1} parent=1 // pred_fallthru
      _
    // Predicated region
    $region10: #{evaluate.1} parent=1 // pred_check
      _
    $region11: #{evaluate.1} parent=1 // pred_check_branch
      %15 = sbr.rel (0) target = $region13
    $region12: #{evaluate.1} parent=1 // pred_region
      %s17 = ssub.s32 2176, 2176
      %18 = vsyncadd [#allocation3], %s17
      %s19 = sshll.u32 [#allocation2], 4
      %s20 = int_to_ptr.vmem [resolvable:$true] %s19
      %25 = dma.hbm_to_vmem [thread:$0]  %s2, 2176, %s20, [#allocation3], 64, 64, 4
    $region13: #{evaluate.1} parent=1 // pred_fallthru
      _
    // Predicated region
    $region14: #{evaluate.1} parent=1 // pred_check
      _
    $region15: #{evaluate.1} parent=1 // pred_check_branch
      %27 = sbr.rel (0) target = $region17
    $region16: #{evaluate.1} parent=1 // pred_region
      _
    $region17: #{evaluate.1} parent=1 // pred_fallthru
      _
    // Predicated region
    $region18: #{evaluate.1} parent=1 // pred_check
      _
    $region19: #{evaluate.1} parent=1 // pred_check_branch
      %29 = sbr.rel (0) target = $region21
    $region20: #{evaluate.1} parent=1 // pred_region
      %30 = dma.done [#allocation3], 2176
    $region21: #{evaluate.1} parent=1 // pred_fallthru
      _
    %v32 = vld [vmem:[%s0] sm:$0xff]
    %v33 = vpack.c.bf16 %v32, %v32
    %v34 = vld [vmem:[#allocation2] sm:$0xf]
    %v35 = vld [vmem:[#allocation2 + $0x4] sm:$0xf]
    %v36 = vld [vmem:[#allocation2 + $0x8] sm:$0xf]
    %v37 = vld [vmem:[#allocation2 + $0xc] sm:$0xf]
    %v38 = vld [vmem:[#allocation2 + $0x10] sm:$0xf]
    %v39 = vld [vmem:[#allocation2 + $0x14] sm:$0xf]
    %v40 = vld [vmem:[#allocation2 + $0x18] sm:$0xf]
    %v41 = vld [vmem:[#allocation2 + $0x1c] sm:$0xf]
    %v42 = vld [vmem:[#allocation2 + $0x20] sm:$0xf]
    %v43 = vld [vmem:[#allocation2 + $0x24] sm:$0xf]
    %v44 = vld [vmem:[#allocation2 + $0x28] sm:$0xf]
    %v45 = vld [vmem:[#allocation2 + $0x2c] sm:$0xf]
    %v46 = vld [vmem:[#allocation2 + $0x30] sm:$0xf]
    %v47 = vld [vmem:[#allocation2 + $0x34] sm:$0xf]
    %v48 = vld [vmem:[#allocation2 + $0x38] sm:$0xf]
    %v49 = vld [vmem:[#allocation2 + $0x3c] sm:$0xf]
    %v50 = vld [vmem:[#allocation2 + $0x40] sm:$0xf]
    %v51 = vld [vmem:[#allocation2 + $0x44] sm:$0xf]
    %v52 = vld [vmem:[#allocation2 + $0x48] sm:$0xf]
    %v53 = vld [vmem:[#allocation2 + $0x4c] sm:$0xf]
    %v54 = vld [vmem:[#allocation2 + $0x50] sm:$0xf]
    %v55 = vld [vmem:[#allocation2 + $0x54] sm:$0xf]
    %v56 = vld [vmem:[#allocation2 + $0x58] sm:$0xf]
    %v57 = vld [vmem:[#allocation2 + $0x5c] sm:$0xf]
    %v58 = vld [vmem:[#allocation2 + $0x60] sm:$0xf]
    %v59 = vld [vmem:[#allocation2 + $0x64] sm:$0xf]
    %v60 = vld [vmem:[#allocation2 + $0x68] sm:$0xf]
    %v61 = vld [vmem:[#allocation2 + $0x6c] sm:$0xf]
    %v62 = vld [vmem:[#allocation2 + $0x70] sm:$0xf]
    %v63 = vld [vmem:[#allocation2 + $0x74] sm:$0xf]
    %v64 = vld [vmem:[#allocation2 + $0x78] sm:$0xf]
    %v65 = vld [vmem:[#allocation2 + $0x7c] sm:$0xf]
    %v66 = vld [vmem:[#allocation2 + $0x80] sm:$0xf]
    %v67 = vld [vmem:[#allocation2 + $0x84] sm:$0xf]
    %v68 = vld [vmem:[%s3] sm:$0x1]
    %v69 = vld [vmem:[%s3 + $0x1] sm:$0x1]
    %v70 = vld [vmem:[%s3 + $0x2] sm:$0x1]
    %v71 = vlaneseq
    %v72 = vshrl.u32 %v71, 7
    %v73 = vsub.s32 0, %v72
    %v74 = vrot.slane %v68, %v73
    %v77 = vunpack.c.l.b16 %v34
    %v78 = vunpack.c.l.b16 %v35
    %v79 = vpack.c.b16 %v78, %v77
    %vm81 = vcmask 130048
    %v83 = vsel %vm81, %v33, 0
    %85 = vmatprep.subr.bf16.mxu0 0
    %86 = vmatpush1.bf16.msra.mxu0 %v79
    %87 = vmatprep.subr.bf16.mxu0 0
    %88 = vmatpush1.bf16.msra.mxu0 0
    %89 = vmatprep.subr.bf16.mxu0 0
    %90 = vmatpush1.bf16.msra.mxu0 0
    %91 = vmatprep.subr.bf16.mxu0 0
    %92 = vmatpush1.bf16.msra.mxu0 0
    %93 = vmatprep.subr.bf16.mxu0 0
    %94 = vmatpush1.bf16.msra.mxu0 0
    %95 = vmatprep.subr.bf16.mxu0 0
    %96 = vmatpush1.bf16.msra.mxu0 0
    %97 = vmatprep.subr.bf16.mxu0 0
    %98 = vmatpush1.bf16.msra.mxu0 0
    %99 = vmatprep.subr.bf16.mxu0 0
    %100 = vmatpush1.bf16.msra.mxu0 0
    %101 = vmatprep.subr.bf16.mxu0 0
    %102 = vmatpush1.bf16.msra.mxu0 0
    %103 = vmatprep.subr.bf16.mxu0 0
    %104 = vmatpush1.bf16.msra.mxu0 0
    %105 = vmatprep.subr.bf16.mxu0 0
    %106 = vmatpush1.bf16.msra.mxu0 0
    %107 = vmatprep.subr.bf16.mxu0 0
    %108 = vmatpush1.bf16.msra.mxu0 0
    %109 = vmatprep.subr.bf16.mxu0 0
    %110 = vmatpush1.bf16.msra.mxu0 0
    %111 = vmatprep.subr.bf16.mxu0 0
    %112 = vmatpush1.bf16.msra.mxu0 0
    %113 = vmatprep.subr.bf16.mxu0 0
    %114 = vmatpush1.bf16.msra.mxu0 0
    %115 = vmatprep.subr.bf16.mxu0 0
    %116 = vmatpush1.bf16.msra.mxu0 0
    %117 = vmatprep.mubr.bf16.mxu0 0
    %118 = vmatmul.mubr.bf16.gmra.mrb[0].mxu0 %v83
    %v119 = vpop.f32.mrb[0].mxu0
    %v120 = vadd.f32 %v74, %v119
    %v121 = vpop.f32.mrb[0].mxu0
    %v122 = vpop.f32.mrb[0].mxu0
    %v123 = vpop.f32.mrb[0].mxu0
    %124 = vdwg.mxu0
    %v125 = vtanh.pop %v120
    %v126 = vpack.c.bf16 %v125, %v125
    %v127 = vlaneseq
    %v128 = vshrl.u32 %v127, 7
    %v129 = vsub.s32 0, %v128
    %v130 = vrot.slane %v69, %v129
    %v147 = vunpack.c.l.b16 %v36
    %v148 = vunpack.c.l.b16 %v37
    %v149 = vunpack.c.l.b16 %v38
    %v150 = vunpack.c.l.b16 %v39
    %v151 = vunpack.c.l.b16 %v40
    %v152 = vunpack.c.l.b16 %v41
    %v153 = vunpack.c.l.b16 %v42
    %v154 = vunpack.c.l.b16 %v43
    %v155 = vunpack.c.l.b16 %v44
    %v156 = vunpack.c.l.b16 %v45
    %v157 = vunpack.c.l.b16 %v46
    %v158 = vunpack.c.l.b16 %v47
    %v159 = vunpack.c.l.b16 %v48
    %v160 = vunpack.c.l.b16 %v49
    %v161 = vunpack.c.l.b16 %v50
    %v162 = vunpack.c.l.b16 %v51
    %v163 = vpack.c.b16 %v148, %v147
    %v164 = vpack.c.b16 %v150, %v149
    %v165 = vpack.c.b16 %v152, %v151
    %v166 = vpack.c.b16 %v154, %v153
    %v167 = vpack.c.b16 %v156, %v155
    %v168 = vpack.c.b16 %v158, %v157
    %v169 = vpack.c.b16 %v160, %v159
    %v170 = vpack.c.b16 %v162, %v161
    %179 = vmatprep.subr.bf16.mxu0 0
    %180 = vmatpush1.bf16.msra.mxu0 %v163
    %181 = vmatprep.subr.bf16.mxu0 0
    %182 = vmatpush1.bf16.msra.mxu0 %v164
    %183 = vmatprep.subr.bf16.mxu0 0
    %184 = vmatpush1.bf16.msra.mxu0 %v165
    %185 = vmatprep.subr.bf16.mxu0 0
    %186 = vmatpush1.bf16.msra.mxu0 %v166
    %187 = vmatprep.subr.bf16.mxu0 0
    %188 = vmatpush1.bf16.msra.mxu0 %v167
    %189 = vmatprep.subr.bf16.mxu0 0
    %190 = vmatpush1.bf16.msra.mxu0 %v168
    %191 = vmatprep.subr.bf16.mxu0 0
    %192 = vmatpush1.bf16.msra.mxu0 %v169
    %193 = vmatprep.subr.bf16.mxu0 0
    %194 = vmatpush1.bf16.msra.mxu0 %v170
    %195 = vmatprep.subr.bf16.mxu0 0
    %196 = vmatpush1.bf16.msra.mxu0 0
    %197 = vmatprep.subr.bf16.mxu0 0
    %198 = vmatpush1.bf16.msra.mxu0 0
    %199 = vmatprep.subr.bf16.mxu0 0
    %200 = vmatpush1.bf16.msra.mxu0 0
    %201 = vmatprep.subr.bf16.mxu0 0
    %202 = vmatpush1.bf16.msra.mxu0 0
    %203 = vmatprep.subr.bf16.mxu0 0
    %204 = vmatpush1.bf16.msra.mxu0 0
    %205 = vmatprep.subr.bf16.mxu0 0
    %206 = vmatpush1.bf16.msra.mxu0 0
    %207 = vmatprep.subr.bf16.mxu0 0
    %208 = vmatpush1.bf16.msra.mxu0 0
    %209 = vmatprep.subr.bf16.mxu0 0
    %210 = vmatpush1.bf16.msra.mxu0 0
    %211 = vmatprep.mubr.bf16.mxu0 0
    %212 = vmatmul.mubr.bf16.gmra.mrb[0].mxu0 %v126
    %v213 = vpop.f32.mrb[0].mxu0
    %v214 = vadd.f32 %v130, %v213
    %v215 = vpop.f32.mrb[0].mxu0
    %v216 = vpop.f32.mrb[0].mxu0
    %v217 = vpop.f32.mrb[0].mxu0
    %218 = vdwg.mxu0
    %v219 = vtanh.pop %v214
    %v220 = vpack.c.bf16 %v219, %v219
    %v221 = vlaneseq
    %v222 = vshrl.u32 %v221, 7
    %v223 = vsub.s32 0, %v222
    %v224 = vrot.slane %v70, %v223
    %v241 = vunpack.c.l.b16 %v52
    %v242 = vunpack.c.l.b16 %v53
    %v243 = vunpack.c.l.b16 %v54
    %v244 = vunpack.c.l.b16 %v55
    %v245 = vunpack.c.l.b16 %v56
    %v246 = vunpack.c.l.b16 %v57
    %v247 = vunpack.c.l.b16 %v58
    %v248 = vunpack.c.l.b16 %v59
    %v249 = vunpack.c.l.b16 %v60
    %v250 = vunpack.c.l.b16 %v61
    %v251 = vunpack.c.l.b16 %v62
    %v252 = vunpack.c.l.b16 %v63
    %v253 = vunpack.c.l.b16 %v64
    %v254 = vunpack.c.l.b16 %v65
    %v255 = vunpack.c.l.b16 %v66
    %v256 = vunpack.c.l.b16 %v67
    %v257 = vpack.c.b16 %v242, %v241
    %v258 = vpack.c.b16 %v244, %v243
    %v259 = vpack.c.b16 %v246, %v245
    %v260 = vpack.c.b16 %v248, %v247
    %v261 = vpack.c.b16 %v250, %v249
    %v262 = vpack.c.b16 %v252, %v251
    %v263 = vpack.c.b16 %v254, %v253
    %v264 = vpack.c.b16 %v256, %v255
    %273 = vmatprep.subr.bf16.mxu0 0
    %274 = vmatpush1.bf16.msra.mxu0 %v257
    %275 = vmatprep.subr.bf16.mxu0 0
    %276 = vmatpush1.bf16.msra.mxu0 %v258
    %277 = vmatprep.subr.bf16.mxu0 0
    %278 = vmatpush1.bf16.msra.mxu0 %v259
    %279 = vmatprep.subr.bf16.mxu0 0
    %280 = vmatpush1.bf16.msra.mxu0 %v260
    %281 = vmatprep.subr.bf16.mxu0 0
    %282 = vmatpush1.bf16.msra.mxu0 %v261
    %283 = vmatprep.subr.bf16.mxu0 0
    %284 = vmatpush1.bf16.msra.mxu0 %v262
    %285 = vmatprep.subr.bf16.mxu0 0
    %286 = vmatpush1.bf16.msra.mxu0 %v263
    %287 = vmatprep.subr.bf16.mxu0 0
    %288 = vmatpush1.bf16.msra.mxu0 %v264
    %289 = vmatprep.subr.bf16.mxu0 0
    %290 = vmatpush1.bf16.msra.mxu0 0
    %291 = vmatprep.subr.bf16.mxu0 0
    %292 = vmatpush1.bf16.msra.mxu0 0
    %293 = vmatprep.subr.bf16.mxu0 0
    %294 = vmatpush1.bf16.msra.mxu0 0
    %295 = vmatprep.subr.bf16.mxu0 0
    %296 = vmatpush1.bf16.msra.mxu0 0
    %297 = vmatprep.subr.bf16.mxu0 0
    %298 = vmatpush1.bf16.msra.mxu0 0
    %299 = vmatprep.subr.bf16.mxu0 0
    %300 = vmatpush1.bf16.msra.mxu0 0
    %301 = vmatprep.subr.bf16.mxu0 0
    %302 = vmatpush1.bf16.msra.mxu0 0
    %303 = vmatprep.subr.bf16.mxu0 0
    %304 = vmatpush1.bf16.msra.mxu0 0
    %305 = vmatprep.mubr.bf16.mxu0 0
    %306 = vmatmul.mubr.bf16.gmra.mrb[0].mxu0 %v220
    %v307 = vpop.f32.mrb[0].mxu0
    %v308 = vadd.f32 %v224, %v307
    %v309 = vpop.f32.mrb[0].mxu0
    %v310 = vpop.f32.mrb[0].mxu0
    %v311 = vpop.f32.mrb[0].mxu0
    %312 = vdwg.mxu0
    %v313 = vlaneseq
    %v314 = vand.u32 %v313, 127
    %vm315 = vcmp.lt.s32.totalorder %v314, 6
    %v316 = vsel %vm315, %v308, -1e+30
    %317 = vmax.xlane.f32.xlu0 %v316
    %v318 = vpop.xlane.xlu0 %317
    %v319 = vsub.f32 %v316, %v318
    %v320 = vmul.f32 %v319, 1.442695
    %v321 = vpow.pop %v320
    %v322 = vsel %vm315, %v321, 0.0
    %323 = vadd.xlane.f32.xlu0 %v322
    %v324 = vpop.xlane.xlu0 %323
    %v325 = vrcp.pop %v324
    %v326 = vmul.f32 %v322, %v325
    %v327 = vlog2.pop %v324
    %v328 = vmul.f32 %v327, 0.6931472
    %v329 = vsub.f32 %v319, %v328
    %v330 = vsel %vm315, %v329, 0.0
    %v331 = vld [vmem:[%s1] sm:$0xff]
    %332 = vset.pattern.permute.xlu0 0
    %333 = vperm.xlu0 %332, %v331
    %v334 = vpop.permute.xlu0 %333
    %vm335 = vcmp.eq.s32.totalorder %v314, %v334
    %v336 = vsel %vm335, 1, 0
    %v337 = vcvt.s32.f32 %v336
    %v338 = vmul.f32 %v337, %v330
    %339 = vadd.xlane.f32.xlu0 %v338
    %v340 = vpop.xlane.xlu0 %339
    %v341 = vmul.f32 %v326, %v330
    %342 = vadd.xlane.f32.xlu0 %v341
    %v343 = vpop.xlane.xlu0 %342
    %v344 = vsub.f32 0.0, %v343
    %vm345 = vcmp.eq.s32.totalorder %v314, 6
    %v346 = vsel %vm345, %v308, 0.0
    %347 = vadd.xlane.f32.xlu0 %v346
    %v348 = vpop.xlane.xlu0 %347
    %vm349 = vcmp.eq.s32.totalorder %v314, 0
    %v350 = vsel %vm349, %v340, 0.0
    %vm351 = vcmp.eq.s32.totalorder %v314, 1
    %v352 = vsel %vm351, %v348, %v350
    %vm353 = vcmp.eq.s32.totalorder %v314, 2
    %v354 = vsel %vm353, %v344, %v352
    %355 = vst [vmem:[%s4] sm:$0xff] %v354
    // Predicated region
    $region22: #{evaluate.1} parent=1 // pred_check
      _
    $region23: #{evaluate.1} parent=1 // pred_check_branch
      %357 = sbr.rel (0) target = $region25
    $region24: #{evaluate.1} parent=1 // pred_region
      _
    $region25: #{evaluate.1} parent=1 // pred_fallthru
      _
    // Predicated region
    $region26: #{evaluate.1} parent=1 // pred_check
      _
    $region27: #{evaluate.1} parent=1 // pred_check_branch
      %359 = sbr.rel (0) target = $region29
    $region28: #{evaluate.1} parent=1 // pred_region
      _
    $region29: #{evaluate.1} parent=1 // pred_fallthru
      _
    %360 = vsyncpa [#allocation3], 1

</llo_original>
